<compile_context>
chip_gen: v5e
topology: v5e:2x2
jax: 0.10.0
libtpu: 0.0.40
codegen_flags: <defaults>
</compile_context>

<pallas_src>
import functools

import jax
import jax.numpy as jnp
from jax.experimental import pallas as pl
from jax.experimental.pallas import tpu as pltpu


LANE_PAD = 128                      # hidden (64) / size_emb (4) padded to 128 lanes
_VMEM_LIMIT = 48 * 1024 * 1024      # safe ceiling on v5e/v6e (128 MiB) and v7x (64 MiB)


def _const_spec(shape):
    """BlockSpec for an operand whose block index never changes across the grid.

    Single-buffered (pl.Buffered(1)) when supported: the default double buffer
    is wasted VMEM for constant-index operands."""
    index_map = lambda *_: (0,) * len(shape)
    try:
        return pl.BlockSpec(shape, index_map, pipeline_mode=pl.Buffered(1))
    except (TypeError, AttributeError):   # older jax without pipeline_mode
        return pl.BlockSpec(shape, index_map)


# ----------------------------- Pallas kernels ---------------------------------

def _gcn_fused_resident_kernel(a_ref, x_ref, w1_ref, b1_ref, w2_ref, b2_ref, o_ref):
    """Both GCN layers in one grid step; A_hat, X and all weights resident in VMEM."""
    # Layer 1, reassociated (transform-then-aggregate): X@W1 once, then A@(XW1).
    xw1 = jnp.dot(x_ref[...], w1_ref[...], preferred_element_type=jnp.float32)
    h = jnp.dot(a_ref[...], xw1.astype(jnp.bfloat16),
                preferred_element_type=jnp.float32)
    h = jnp.maximum(h + b1_ref[...], 0.0).astype(jnp.bfloat16)        # [N, 128]
    # TODO(synk): training-mode dropout(p=0.5) would go here (inference = identity).
    # Layer 2 (aggregate-then-transform: A@H is already lane-dense 128 wide).
    ah = jnp.dot(a_ref[...], h, preferred_element_type=jnp.float32)
    out = jnp.dot(ah.astype(jnp.bfloat16), w2_ref[...],
                  preferred_element_type=jnp.float32)
    o_ref[...] = (out + b2_ref[...]).astype(o_ref.dtype)


def _agg_kernel(a_ref, z_ref, b_ref, o_ref, *, relu):
    """o_rows = maybe_relu(A[rows, :] @ Z + b), Z lane-dense [N, 128]."""
    y = jnp.dot(a_ref[...], z_ref[...], preferred_element_type=jnp.float32)
    y = y + b_ref[...]
    if relu:
        y = jnp.maximum(y, 0.0)
    o_ref[...] = y.astype(o_ref.dtype)


def _agg_transform_kernel(a_ref, z_ref, w_ref, b_ref, o_ref, *, relu):
    """o_rows = maybe_relu((A[rows, :] @ Z) @ W + b)."""
    az = jnp.dot(a_ref[...], z_ref[...], preferred_element_type=jnp.float32)
    y = jnp.dot(az.astype(jnp.bfloat16), w_ref[...],
                preferred_element_type=jnp.float32)
    y = y + b_ref[...]
    if relu:
        y = jnp.maximum(y, 0.0)
    o_ref[...] = y.astype(o_ref.dtype)


def _gcn_layer_tiled(a_bf, z_bf, b_pad, w_bf=None, *, relu, tm):
    """One GCNConv propagation streamed over [tm, N] row slabs of A_hat.

    Row tiles are independent -> "parallel" grid axis (v7x megacore splits it).
    Z / W / b never change block index -> resident, single-buffered."""
    n = a_bf.shape[0]
    assert n % tm == 0 and tm % 8 == 0, (n, tm)

    if w_bf is None:
        kernel = functools.partial(_agg_kernel, relu=relu)
        operands = (a_bf, z_bf, b_pad)
        in_specs = [pl.BlockSpec((tm, n), lambda i: (i, 0)),
                    _const_spec(z_bf.shape), _const_spec(b_pad.shape)]
    else:
        kernel = functools.partial(_agg_transform_kernel, relu=relu)
        operands = (a_bf, z_bf, w_bf, b_pad)
        in_specs = [pl.BlockSpec((tm, n), lambda i: (i, 0)),
                    _const_spec(z_bf.shape), _const_spec(w_bf.shape),
                    _const_spec(b_pad.shape)]

    return pl.pallas_call(
        kernel,
        out_shape=jax.ShapeDtypeStruct((n, LANE_PAD), jnp.bfloat16),
        grid=(n // tm,),
        in_specs=in_specs,
        out_specs=pl.BlockSpec((tm, LANE_PAD), lambda i: (i, 0)),
        compiler_params=pltpu.CompilerParams(
            dimension_semantics=("parallel",),
            vmem_limit_bytes=_VMEM_LIMIT),
    )(*operands)


# ------------------------------- Wrapper ---------------------------------------

def _pad_cols(m, width, dtype):
    out = jnp.zeros((m.shape[0], width), jnp.float32).at[:, :m.shape[1]].set(m)
    return out.astype(dtype)


def gcn_forward(params, x, a_norm, *, tm=None, force_tiled=False,
                vmem_budget_bytes=40 * 1024 * 1024):
    """Two-layer GCN forward: relu(A(XW1)+b1) -> A(HW2)+b2 (dropout = identity)."""
    n, f_in = x.shape
    hidden = params["w1"].shape[1]
    size_emb = params["w2"].shape[1]
    assert hidden <= LANE_PAD and size_emb <= LANE_PAD

    # Lane-dense, zero-padded parameters (padded entries are exactly zero, so the
    # padded output columns stay zero and slicing below is exact).
    w1p = _pad_cols(params["w1"], LANE_PAD, jnp.bfloat16)                 # [f_in, 128]
    b1p = _pad_cols(params["b1"], LANE_PAD, jnp.float32)                  # [1, 128]
    w2p = (jnp.zeros((LANE_PAD, LANE_PAD), jnp.float32)
           .at[:hidden, :size_emb].set(params["w2"]).astype(jnp.bfloat16))
    b2p = _pad_cols(params["b2"], LANE_PAD, jnp.float32)                  # [1, 128]
    a_bf = a_norm.astype(jnp.bfloat16)

    # Conservative estimate for the fully-resident path (A possibly double
    # buffered + padded activations + headroom).
    resident_bytes = 4 * n * n + 4096 * n + (2 << 20)
    use_resident = (not force_tiled) and resident_bytes <= vmem_budget_bytes

    if use_resident:
        # A_hat read from HBM exactly once; both layers fused; single grid step.
        out_pad = pl.pallas_call(
            _gcn_fused_resident_kernel,
            out_shape=jax.ShapeDtypeStruct((n, LANE_PAD), jnp.bfloat16),
            grid=(1,),
            in_specs=[
                _const_spec((n, n)),                # A_hat (bf16, resident)
                _const_spec((n, f_in)),             # X
                _const_spec((f_in, LANE_PAD)),      # W1 padded
                _const_spec((1, LANE_PAD)),         # b1 padded
                _const_spec((LANE_PAD, LANE_PAD)),  # W2 padded
                _const_spec((1, LANE_PAD)),         # b2 padded
            ],
            out_specs=pl.BlockSpec((n, LANE_PAD), lambda i: (0, 0)),
            compiler_params=pltpu.CompilerParams(
                dimension_semantics=("arbitrary",),
                vmem_limit_bytes=_VMEM_LIMIT),
        )(a_bf, x.astype(jnp.bfloat16), w1p, b1p, w2p, b2p)
    else:
        if tm is None:
            tm = next((t for t in (512, 256, 128, 64, 32, 16, 8) if n % t == 0), n)
        # X@W1 is O(N*F_in*hidden) -- negligible next to the O(N^2) aggregation;
        # doing it up front keeps the lane-sparse [N, F_in] X out of the streamed
        # kernel (perf-review reassociation).
        xw1p = _pad_cols(x @ params["w1"], LANE_PAD, jnp.bfloat16)        # [N, 128]
        h = _gcn_layer_tiled(a_bf, xw1p, b1p, relu=True, tm=tm)           # [N, 128] bf16
        # TODO(synk): training-mode dropout(p=0.5) would apply to h here.
        out_pad = _gcn_layer_tiled(a_bf, h, b2p, w2p, relu=False, tm=tm)
        # TODO(synk): for N where even a [tm, N] slab is too big (v7x 64 MiB VMEM),
        # add a k grid axis over N with an f32 accumulator; for symmetric A_hat a
        # single-pass "out += A_j^T @ (H_j @ W2)" accumulator halves A traffic again.

    return out_pad[:, :size_emb].astype(jnp.float32)


# ------------------------------ Glue (plain JAX) -------------------------------

def normalized_adjacency(edge_index, num_nodes):
    """Dense D^-1/2 (A + I) D^-1/2, matching GCNConv(normalize=True,
    add_self_loops=True).  edge_index is [2, E] (source, target); messages flow
    source -> target, so A[target, source] = 1."""
    src, dst = edge_index
    adj = jnp.zeros((num_nodes, num_nodes), jnp.float32)
    adj = adj.at[dst, src].set(1.0)
    adj = adj + jnp.eye(num_nodes, dtype=jnp.float32)   # self loops
    deg = adj.sum(axis=1)
    d_inv_sqrt = jnp.where(deg > 0, 1.0 / jnp.sqrt(deg), 0.0)
    return d_inv_sqrt[:, None] * adj * d_inv_sqrt[None, :]


def glorot(key, shape):
    fan_in, fan_out = shape
    limit = jnp.sqrt(6.0 / (fan_in + fan_out))
    return jax.random.uniform(key, shape, jnp.float32, -limit, limit)


def init_gcn_params(key, num_features, size_emb, hidden=64):
    k1, k2 = jax.random.split(key)
    return {
        "w1": glorot(k1, (num_features, hidden)),
        "b1": jnp.zeros((1, hidden), jnp.float32),
        "w2": glorot(k2, (hidden, size_emb)),
        "b2": jnp.zeros((1, size_emb), jnp.float32),
    }


def gcn_reference(params, x, a_norm):
    """Pure-JAX f32 reference of the PyTorch forward (dropout = identity)."""
    h = jnp.maximum(a_norm @ (x @ params["w1"]) + params["b1"], 0.0)
    return a_norm @ (h @ params["w2"]) + params["b2"]


# ---------------------------------- Main ---------------------------------------

if __name__ == "__main__":
    key = jax.random.PRNGKey(0)
    k_x, k_params = jax.random.split(key)

    num_nodes = 32
    num_features = 8
    size_emb = 4

    # Node features.
    x = jax.random.normal(k_x, (num_nodes, num_features), jnp.float32)

    # Deterministic ring graph, both directions: [2, E].
    src = jnp.arange(num_nodes, dtype=jnp.int32)
    dst = (src + 1) % num_nodes
    edge_index = jnp.stack(
        [jnp.concatenate([src, dst]), jnp.concatenate([dst, src])], axis=0)

    a_norm = normalized_adjacency(edge_index, num_nodes)
    params = init_gcn_params(k_params, num_features, size_emb)

    ref = gcn_reference(params, x, a_norm)

    # Fast path (default at this size): A_hat resident, single fused kernel step.
    out = jax.block_until_ready(jax.jit(gcn_forward)(params, x, a_norm))
    assert out.shape == (num_nodes, size_emb)
    assert bool(jnp.all(jnp.isfinite(out)))
    max_err = float(jnp.max(jnp.abs(out - ref)))
    assert bool(jnp.allclose(out, ref, rtol=1e-1, atol=1e-1)), max_err

    # Large-graph path (forced here to validate): per-layer row-tiled streaming.
    fwd_tiled = jax.jit(functools.partial(gcn_forward, force_tiled=True, tm=16))
    out_t = jax.block_until_ready(fwd_tiled(params, x, a_norm))
    assert out_t.shape == (num_nodes, size_emb)
    max_err_t = float(jnp.max(jnp.abs(out_t - ref)))
    assert bool(jnp.allclose(out_t, ref, rtol=1e-1, atol=1e-1)), max_err_t

    print("KERNEL_OK")
</pallas_src>

<mosaic_0001>
module attributes {stable_mosaic.version = 11 : i64} {
  func.func @_gcn_fused_resident_kernel(%arg0: i32, %arg1: memref<32x32xbf16, #tpu.memory_space<vmem>>, %arg2: memref<32x8xbf16, #tpu.memory_space<vmem>>, %arg3: memref<8x128xbf16, #tpu.memory_space<vmem>>, %arg4: memref<1x128xf32, #tpu.memory_space<vmem>>, %arg5: memref<128x128xbf16, #tpu.memory_space<vmem>>, %arg6: memref<1x128xf32, #tpu.memory_space<vmem>>, %arg7: memref<32x128xbf16, #tpu.memory_space<vmem>>) attributes {dimension_semantics = [#tpu.dimension_semantics<arbitrary>], iteration_bounds = array<i64: 1>, scalar_prefetch = 0 : i64, scratch_operands = 0 : i64, tpu.core_type = #tpu.core_type<tc>, window_params = [{pipeline_mode = #tpu.pipeline_mode<synchronous>, transform_indices = @transform_0, window_bounds = array<i64: 32, 32>}, {pipeline_mode = #tpu.pipeline_mode<synchronous>, transform_indices = @transform_1, window_bounds = array<i64: 32, 8>}, {pipeline_mode = #tpu.pipeline_mode<synchronous>, transform_indices = @transform_2, window_bounds = array<i64: 8, 128>}, {pipeline_mode = #tpu.pipeline_mode<synchronous>, transform_indices = @transform_3, window_bounds = array<i64: 1, 128>}, {pipeline_mode = #tpu.pipeline_mode<synchronous>, transform_indices = @transform_4, window_bounds = array<i64: 128, 128>}, {pipeline_mode = #tpu.pipeline_mode<synchronous>, transform_indices = @transform_5, window_bounds = array<i64: 1, 128>}, {pipeline_mode = #tpu.pipeline_mode<synchronous>, transform_indices = @transform_6, window_bounds = array<i64: 32, 128>}]} {
    %c0 = arith.constant 0 : index
    %c0_0 = arith.constant 0 : index
    %0 = vector.load %arg2[%c0, %c0_0] : memref<32x8xbf16, #tpu.memory_space<vmem>>, vector<32x8xbf16>
    %c0_1 = arith.constant 0 : index
    %c0_2 = arith.constant 0 : index
    %1 = vector.load %arg3[%c0_1, %c0_2] : memref<8x128xbf16, #tpu.memory_space<vmem>>, vector<8x128xbf16>
    %cst = arith.constant dense<0.000000e+00> : vector<32x128xf32>
    %2 = tpu.matmul %0, %1, %cst {dimension_numbers = #tpu.dot_dimension_numbers<[1], [0], [0], [1], [0, 0, 1, 1], [], []>} : vector<32x8xbf16>, vector<8x128xbf16>, vector<32x128xf32> -> vector<32x128xf32>
    %c0_3 = arith.constant 0 : index
    %c0_4 = arith.constant 0 : index
    %3 = vector.load %arg1[%c0_3, %c0_4] : memref<32x32xbf16, #tpu.memory_space<vmem>>, vector<32x32xbf16>
    %4 = arith.truncf %2 : vector<32x128xf32> to vector<32x128xbf16>
    %cst_5 = arith.constant dense<0.000000e+00> : vector<32x128xf32>
    %5 = tpu.matmul %3, %4, %cst_5 {dimension_numbers = #tpu.dot_dimension_numbers<[1], [0], [0], [1], [0, 0, 1, 1], [], []>} : vector<32x32xbf16>, vector<32x128xbf16>, vector<32x128xf32> -> vector<32x128xf32>
    %c0_6 = arith.constant 0 : index
    %c0_7 = arith.constant 0 : index
    %6 = vector.load %arg4[%c0_6, %c0_7] : memref<1x128xf32, #tpu.memory_space<vmem>>, vector<1x128xf32>
    %7 = vector.broadcast %6 : vector<1x128xf32> to vector<32x128xf32>
    %8 = arith.addf %5, %7 : vector<32x128xf32>
    %cst_8 = arith.constant 0.000000e+00 : f32
    %9 = vector.broadcast %cst_8 : f32 to vector<32x128xf32>
    %10 = arith.maximumf %8, %9 : vector<32x128xf32>
    %11 = arith.truncf %10 : vector<32x128xf32> to vector<32x128xbf16>
    %c0_9 = arith.constant 0 : index
    %c0_10 = arith.constant 0 : index
    %12 = vector.load %arg1[%c0_9, %c0_10] : memref<32x32xbf16, #tpu.memory_space<vmem>>, vector<32x32xbf16>
    %cst_11 = arith.constant dense<0.000000e+00> : vector<32x128xf32>
    %13 = tpu.matmul %12, %11, %cst_11 {dimension_numbers = #tpu.dot_dimension_numbers<[1], [0], [0], [1], [0, 0, 1, 1], [], []>} : vector<32x32xbf16>, vector<32x128xbf16>, vector<32x128xf32> -> vector<32x128xf32>
    %14 = arith.truncf %13 : vector<32x128xf32> to vector<32x128xbf16>
    %c0_12 = arith.constant 0 : index
    %c0_13 = arith.constant 0 : index
    %15 = vector.load %arg5[%c0_12, %c0_13] : memref<128x128xbf16, #tpu.memory_space<vmem>>, vector<128x128xbf16>
    %cst_14 = arith.constant dense<0.000000e+00> : vector<32x128xf32>
    %16 = tpu.matmul %14, %15, %cst_14 {dimension_numbers = #tpu.dot_dimension_numbers<[1], [0], [0], [1], [0, 0, 1, 1], [], []>} : vector<32x128xbf16>, vector<128x128xbf16>, vector<32x128xf32> -> vector<32x128xf32>
    %c0_15 = arith.constant 0 : index
    %c0_16 = arith.constant 0 : index
    %17 = vector.load %arg6[%c0_15, %c0_16] : memref<1x128xf32, #tpu.memory_space<vmem>>, vector<1x128xf32>
    %18 = vector.broadcast %17 : vector<1x128xf32> to vector<32x128xf32>
    %19 = arith.addf %16, %18 : vector<32x128xf32>
    %20 = arith.truncf %19 : vector<32x128xf32> to vector<32x128xbf16>
    %c0_17 = arith.constant 0 : index
    %c0_18 = arith.constant 0 : index
    %21 = vector.load %arg7[%c0_17, %c0_18] : memref<32x128xbf16, #tpu.memory_space<vmem>>, vector<32x128xbf16>
    tpu.vector_store %arg7[%c0_17, %c0_18], %20 {strides = array<i32>} : memref<32x128xbf16, #tpu.memory_space<vmem>>, vector<32x128xbf16>,
    return
  }
  func.func @transform_0(%arg0: i32) -> (i32, i32) {
    %c0_i32 = arith.constant 0 : i32
    %c0_i32_0 = arith.constant 0 : i32
    %c0_i32_1 = arith.constant 0 : i32
    return %c0_i32, %c0_i32_0 : i32, i32
  }
  func.func @transform_1(%arg0: i32) -> (i32, i32) {
    %c0_i32 = arith.constant 0 : i32
    %c0_i32_0 = arith.constant 0 : i32
    %c0_i32_1 = arith.constant 0 : i32
    return %c0_i32, %c0_i32_0 : i32, i32
  }
  func.func @transform_2(%arg0: i32) -> (i32, i32) {
    %c0_i32 = arith.constant 0 : i32
    %c0_i32_0 = arith.constant 0 : i32
    %c0_i32_1 = arith.constant 0 : i32
    return %c0_i32, %c0_i32_0 : i32, i32
  }
  func.func @transform_3(%arg0: i32) -> (i32, i32) {
    %c0_i32 = arith.constant 0 : i32
    %c0_i32_0 = arith.constant 0 : i32
    %c0_i32_1 = arith.constant 0 : i32
    return %c0_i32, %c0_i32_0 : i32, i32
  }
  func.func @transform_4(%arg0: i32) -> (i32, i32) {
    %c0_i32 = arith.constant 0 : i32
    %c0_i32_0 = arith.constant 0 : i32
    %c0_i32_1 = arith.constant 0 : i32
    return %c0_i32, %c0_i32_0 : i32, i32
  }
  func.func @transform_5(%arg0: i32) -> (i32, i32) {
    %c0_i32 = arith.constant 0 : i32
    %c0_i32_0 = arith.constant 0 : i32
    %c0_i32_1 = arith.constant 0 : i32
    return %c0_i32, %c0_i32_0 : i32, i32
  }
  func.func @transform_6(%arg0: i32) -> (i32, i32) {
    %c0_i32 = arith.constant 0 : i32
    %c0_i32_0 = arith.constant 0 : i32
    %c0_i32_1 = arith.constant 0 : i32
    return %c0_i32, %c0_i32_0 : i32, i32
  }
}

</mosaic_0001>

<llo_original>
// kernel: gcn_forward.1
$region0: #{gcn_forward.1}
  #allocation0 [shape = 'u32[]', space=smem, size = 0x4, offset = 0x4, fixed_abs, tag = 'smem constant byte address 0x4 - core index']
  #allocation1 [shape = 'u32[72,128]{1,0:T(1,128)}', space=vmem, size = 0x9000, scoped, tag = 'internal scratch']
  %s0 = inlined_call_operand.vmem [shape: bf16[32,32], index: 0, kind: input, shape index: {}]
  %s1 = inlined_call_operand.vmem [shape: bf16[32,8], index: 1, kind: input, shape index: {}]
  %s2 = inlined_call_operand.vmem [shape: bf16[8,128], index: 2, kind: input, shape index: {}]
  %s3 = inlined_call_operand.vmem [shape: f32[1,128], index: 3, kind: input, shape index: {}]
  %s4 = inlined_call_operand.vmem [shape: bf16[128,128], index: 4, kind: input, shape index: {}]
  %s5 = inlined_call_operand.vmem [shape: f32[1,128], index: 5, kind: input, shape index: {}]
  %s6 = inlined_call_operand.vmem [shape: bf16[32,128], index: 6, kind: output, shape index: {}]
  %s7 = sld [smem:[#allocation0]]
  $region34: #{gcn_forward.1} parent=0
    _
  %s9 = ssub.s32 1, %s7
  %s10 = scalar_select 0, %s9, %s7
  // Predicated region
  $region2: #{gcn_forward.1} parent=0 // pred_check
    _
  $region3: #{gcn_forward.1} parent=0 // pred_check_branch
    %12 = sbr.rel (0) target = $region5
  $region4: #{gcn_forward.1} parent=0 // pred_region
    _
  $region5: #{gcn_forward.1} parent=0 // pred_fallthru
    _
  // Predicated region
  $region6: #{gcn_forward.1} parent=0 // pred_check
    _
  $region7: #{gcn_forward.1} parent=0 // pred_check_branch
    %14 = sbr.rel (0) target = $region9
  $region8: #{gcn_forward.1} parent=0 // pred_region
    _
  $region9: #{gcn_forward.1} parent=0 // pred_fallthru
    _
  // Predicated region
  $region10: #{gcn_forward.1} parent=0 // pred_check
    _
  $region11: #{gcn_forward.1} parent=0 // pred_check_branch
    %16 = sbr.rel (0) target = $region13
  $region12: #{gcn_forward.1} parent=0 // pred_region
    _
  $region13: #{gcn_forward.1} parent=0 // pred_fallthru
    _
  // Predicated region
  $region14: #{gcn_forward.1} parent=0 // pred_check
    _
  $region15: #{gcn_forward.1} parent=0 // pred_check_branch
    %18 = sbr.rel (0) target = $region17
  $region16: #{gcn_forward.1} parent=0 // pred_region
    _
  $region17: #{gcn_forward.1} parent=0 // pred_fallthru
    _
  // Predicated region
  $region18: #{gcn_forward.1} parent=0 // pred_check
    _
  $region19: #{gcn_forward.1} parent=0 // pred_check_branch
    %20 = sbr.rel (0) target = $region21
  $region20: #{gcn_forward.1} parent=0 // pred_region
    _
  $region21: #{gcn_forward.1} parent=0 // pred_fallthru
    _
  // Predicated region
  $region22: #{gcn_forward.1} parent=0 // pred_check
    _
  $region23: #{gcn_forward.1} parent=0 // pred_check_branch
    %22 = sbr.rel (0) target = $region25
  $region24: #{gcn_forward.1} parent=0 // pred_region
    _
  $region25: #{gcn_forward.1} parent=0 // pred_fallthru
    _
  %v24 = vld [vmem:[%s1] sm:$0xf]
  %v25 = vld [vmem:[%s1 + $0x4] sm:$0xf]
  %v26 = vld [vmem:[%s1 + $0x8] sm:$0xf]
  %v27 = vld [vmem:[%s1 + $0xc] sm:$0xf]
  %v28 = vld [vmem:[%s2] sm:$0xf]
  %v33 = vunpack.c.l.b16 %v24
  %v34 = vunpack.c.l.b16 %v25
  %v35 = vunpack.c.l.b16 %v26
  %v36 = vunpack.c.l.b16 %v27
  %v37 = vpack.c.b16 %v34, %v33
  %v38 = vpack.c.b16 %v36, %v35
  %vm39 = vcmask 64512
  %v41 = vsel %vm39, %v37, 0
  %v44 = vsel %vm39, %v38, 0
  %vm46 = vcmask 1043456
  %v48 = vsel %vm46, %v28, 0
  %50 = vmatpush.bf16.msra.mxu0 0
  %51 = vmatpush.bf16.msra.mxu0 0
  %52 = vmatpush.bf16.msra.mxu0 0
  %53 = vmatpush.bf16.msra.mxu0 0
  %54 = vmatpush.bf16.msra.mxu0 0
  %55 = vmatpush.bf16.msra.mxu0 0
  %56 = vmatpush.bf16.msra.mxu0 0
  %57 = vmatpush.bf16.msra.mxu0 %v48
  %58 = vmatmul.bf16.gmra.mxu0 %v41
  %v59 = vpop.f32.mrf.mxu0
  %v60 = vadd.f32 0.0, %v59
  %v61 = vpop.f32.mrf.mxu0
  %v62 = vadd.f32 0.0, %v61
  %63 = vmatmul.bf16.gmra.mxu0 %v44
  %v64 = vpop.f32.mrf.mxu0
  %v65 = vadd.f32 0.0, %v64
  %v66 = vpop.f32.mrf.mxu0
  %v67 = vadd.f32 0.0, %v66
  %68 = vdwg.mxu0
  %v69 = vld [vmem:[%s0] sm:$0xf]
  %v70 = vld [vmem:[%s0 + $0x4] sm:$0xf]
  %v71 = vld [vmem:[%s0 + $0x8] sm:$0xf]
  %v72 = vld [vmem:[%s0 + $0xc] sm:$0xf]
  %v73 = vpack.c.bf16 %v62, %v60
  %v74 = vpack.c.bf16 %v67, %v65
  %v75 = vld [vmem:[%s3] sm:$0x1]
  %v77 = vperm.slane %v75, 0
  %v83 = vunpack.c.l.b16 %v69
  %v84 = vunpack.c.l.b16 %v70
  %v85 = vunpack.c.l.b16 %v71
  %v86 = vunpack.c.l.b16 %v72
  %v87 = vpack.c.b16 %v84, %v83
  %v88 = vpack.c.b16 %v86, %v85
  %vm89 = vcmask 261120
  %v91 = vsel %vm89, %v87, 0
  %v94 = vsel %vm89, %v88, 0
  %96 = vmatpush.bf16.msra.mxu0 0
  %97 = vmatpush.bf16.msra.mxu0 0
  %98 = vmatpush.bf16.msra.mxu0 0
  %99 = vmatpush.bf16.msra.mxu0 0
  %100 = vmatpush.bf16.msra.mxu0 0
  %101 = vmatpush.bf16.msra.mxu0 0
  %102 = vmatpush.bf16.msra.mxu0 %v74
  %103 = vmatpush.bf16.msra.mxu0 %v73
  %104 = vmatmul.bf16.gmra.mxu0 %v91
  %v105 = vpop.f32.mrf.mxu0
  %v106 = vadd.f32 %v77, %v105
  %v107 = vpop.f32.mrf.mxu0
  %v108 = vadd.f32 %v77, %v107
  %109 = vmatmul.bf16.gmra.mxu0 %v94
  %v110 = vpop.f32.mrf.mxu0
  %v111 = vadd.f32 %v77, %v110
  %v112 = vpop.f32.mrf.mxu0
  %v113 = vadd.f32 %v77, %v112
  %114 = vdwg.mxu0
  %v115 = vmax.f32 %v106, 0.0
  %v116 = vmax.f32 %v108, 0.0
  %v117 = vmax.f32 %v111, 0.0
  %v118 = vmax.f32 %v113, 0.0
  %v119 = vpack.c.bf16 %v116, %v115
  %v120 = vpack.c.bf16 %v118, %v117
  %121 = vmatpush.bf16.msra.mxu0 0
  %122 = vmatpush.bf16.msra.mxu0 0
  %123 = vmatpush.bf16.msra.mxu0 0
  %124 = vmatpush.bf16.msra.mxu0 0
  %125 = vmatpush.bf16.msra.mxu0 0
  %126 = vmatpush.bf16.msra.mxu0 0
  %127 = vmatpush.bf16.msra.mxu0 %v120
  %128 = vmatpush.bf16.msra.mxu0 %v119
  %129 = vmatmul.bf16.gmra.mxu0 %v91
  %v130 = vpop.f32.mrf.mxu0
  %v131 = vadd.f32 0.0, %v130
  %v132 = vpop.f32.mrf.mxu0
  %v133 = vadd.f32 0.0, %v132
  %134 = vmatmul.bf16.gmra.mxu0 %v94
  %v135 = vpop.f32.mrf.mxu0
  %v136 = vadd.f32 0.0, %v135
  %v137 = vpop.f32.mrf.mxu0
  %v138 = vadd.f32 0.0, %v137
  %139 = vdwg.mxu0
  %v140 = vpack.c.bf16 %v133, %v131
  %v141 = vpack.c.bf16 %v138, %v136
  %v142 = vld [vmem:[%s4] sm:$0xf]
  %v143 = vld [vmem:[%s4 + $0x4] sm:$0xf]
  %v144 = vld [vmem:[%s4 + $0x8] sm:$0xf]
  %v145 = vld [vmem:[%s4 + $0xc] sm:$0xf]
  %v146 = vld [vmem:[%s4 + $0x10] sm:$0xf]
  %v147 = vld [vmem:[%s4 + $0x14] sm:$0xf]
  %v148 = vld [vmem:[%s4 + $0x18] sm:$0xf]
  %v149 = vld [vmem:[%s4 + $0x1c] sm:$0xf]
  %v150 = vld [vmem:[%s4 + $0x20] sm:$0xf]
  %v151 = vld [vmem:[%s4 + $0x24] sm:$0xf]
  %v152 = vld [vmem:[%s4 + $0x28] sm:$0xf]
  %v153 = vld [vmem:[%s4 + $0x2c] sm:$0xf]
  %v154 = vld [vmem:[%s4 + $0x30] sm:$0xf]
  %v155 = vld [vmem:[%s4 + $0x34] sm:$0xf]
  %v156 = vld [vmem:[%s4 + $0x38] sm:$0xf]
  %v157 = vld [vmem:[%s4 + $0x3c] sm:$0xf]
  %v158 = vld [vmem:[%s5] sm:$0x1]
  %v160 = vperm.slane %v158, 0
  %v178 = vunpack.c.l.b16 %v142
  %v179 = vunpack.c.l.b16 %v143
  %v180 = vunpack.c.l.b16 %v144
  %v181 = vunpack.c.l.b16 %v145
  %v182 = vunpack.c.l.b16 %v146
  %v183 = vunpack.c.l.b16 %v147
  %v184 = vunpack.c.l.b16 %v148
  %v185 = vunpack.c.l.b16 %v149
  %v186 = vunpack.c.l.b16 %v150
  %v187 = vunpack.c.l.b16 %v151
  %v188 = vunpack.c.l.b16 %v152
  %v189 = vunpack.c.l.b16 %v153
  %v190 = vunpack.c.l.b16 %v154
  %v191 = vunpack.c.l.b16 %v155
  %v192 = vunpack.c.l.b16 %v156
  %v193 = vunpack.c.l.b16 %v157
  %v194 = vpack.c.b16 %v179, %v178
  %v195 = vpack.c.b16 %v181, %v180
  %v196 = vpack.c.b16 %v183, %v182
  %v197 = vpack.c.b16 %v185, %v184
  %v198 = vpack.c.b16 %v187, %v186
  %v199 = vpack.c.b16 %v189, %v188
  %v200 = vpack.c.b16 %v191, %v190
  %v201 = vpack.c.b16 %v193, %v192
  %210 = vmatpush.bf16.msra.mxu0 %v201
  %211 = vmatpush.bf16.msra.mxu0 %v200
  %212 = vmatpush.bf16.msra.mxu0 %v199
  %213 = vmatpush.bf16.msra.mxu0 %v198
  %214 = vmatpush.bf16.msra.mxu0 %v197
  %215 = vmatpush.bf16.msra.mxu0 %v196
  %216 = vmatpush.bf16.msra.mxu0 %v195
  %217 = vmatpush.bf16.msra.mxu0 %v194
  %218 = vmatmul.bf16.gmra.mxu0 %v140
  %v219 = vpop.f32.mrf.mxu0
  %v220 = vadd.f32 %v160, %v219
  %v221 = vpop.f32.mrf.mxu0
  %v222 = vadd.f32 %v160, %v221
  %223 = vmatmul.bf16.gmra.mxu0 %v141
  %v224 = vpop.f32.mrf.mxu0
  %v225 = vadd.f32 %v160, %v224
  %v226 = vpop.f32.mrf.mxu0
  %v227 = vadd.f32 %v160, %v226
  %228 = vdwg.mxu0
  %v229 = vpack.c.bf16 %v220, %v220
  %v230 = vpack.c.bf16 %v222, %v222
  %v231 = vpack.c.bf16 %v225, %v225
  %v232 = vpack.c.bf16 %v227, %v227
  %233 = vst [vmem:[%s6] sm:$0xf] %v229
  %234 = vst [vmem:[%s6 + $0x4] sm:$0xf] %v230
  %235 = vst [vmem:[%s6 + $0x8] sm:$0xf] %v231
  %236 = vst [vmem:[%s6 + $0xc] sm:$0xf] %v232
  // Predicated region
  $region26: #{gcn_forward.1} parent=0 // pred_check
    _
  $region27: #{gcn_forward.1} parent=0 // pred_check_branch
    %238 = sbr.rel (0) target = $region29
  $region28: #{gcn_forward.1} parent=0 // pred_region
    _
  $region29: #{gcn_forward.1} parent=0 // pred_fallthru
    _
  // Predicated region
  $region30: #{gcn_forward.1} parent=0 // pred_check
    _
  $region31: #{gcn_forward.1} parent=0 // pred_check_branch
    %240 = sbr.rel (0) target = $region33
  $region32: #{gcn_forward.1} parent=0 // pred_region
    _
  $region33: #{gcn_forward.1} parent=0 // pred_fallthru
    _

</llo_original>
